<compile_context>
chip_gen: v6e
topology: v6e:2x2x1
jax: 0.10.0
libtpu: 0.0.40
codegen_flags: <defaults>
</compile_context>

<pallas_src>
import math
import functools

import numpy as np
import jax
import jax.numpy as jnp
from jax import lax
from jax.experimental import pallas as pl
from jax.experimental.pallas import tpu as pltpu


def _vmem_limit_bytes():
    """~75% of this generation's VMEM; 64 MiB (v7x per-TC) fallback."""
    cap = 64 * 1024 * 1024
    try:
        info = pltpu.get_tpu_info()
        cap = int(getattr(info, "vmem_capacity_bytes", cap))
    except Exception:
        pass
    return (cap * 3) // 4


_VMEM_LIMIT = _vmem_limit_bytes()


def _pick_tile(dim, target, align=128):
    """Largest multiple of `align` <= target that divides dim; else full dim
    (always legal: block equal to the full array extent)."""
    if dim <= target:
        return dim
    t = (min(target, dim) // align) * align
    while t >= align:
        if dim % t == 0:
            return t
        t -= align
    return dim


def _pick_head_group(n_heads, head_dim):
    """Smallest divisor G of n_heads with G*head_dim a multiple of 128 (lane-
    aligned group slices); fall back to all heads (full-D blocks)."""
    for g in range(1, n_heads + 1):
        if n_heads % g == 0 and (g * head_dim) % 128 == 0:
            return g
    return n_heads


# ---------------------------------------------------------------------------
# Kernel 1: tiled, pipelined matmul (standalone projections / wo)
# ---------------------------------------------------------------------------
def _matmul_kernel(x_ref, w_ref, o_ref, acc_ref, *, compute_dtype):
    @pl.when(pl.program_id(2) == 0)
    def _():
        acc_ref[...] = jnp.zeros_like(acc_ref)

    acc_ref[...] += jnp.dot(
        x_ref[...].astype(compute_dtype),
        w_ref[...].astype(compute_dtype),
        preferred_element_type=jnp.float32,
    )

    @pl.when(pl.program_id(2) == pl.num_programs(2) - 1)
    def _():
        o_ref[...] = acc_ref[...].astype(o_ref.dtype)


def pallas_linear(x, w, *, compute_dtype=jnp.bfloat16, out_dtype=None,
                  tm=512, tn=512, tk=512):
    """x: (M, K), w: (K, N) -> (M, N).  K-tiled with a resident f32 accumulator;
    MXU operands cast to compute_dtype (bf16-native MXUs)."""
    M, K = x.shape
    K2, N = w.shape
    assert K == K2
    out_dtype = np.dtype(out_dtype if out_dtype is not None else x.dtype)
    tm = _pick_tile(M, tm, align=8)
    tn = _pick_tile(N, tn, align=128)
    tk = _pick_tile(K, tk, align=128)
    grid = (M // tm, N // tn, K // tk)

    cost = pl.CostEstimate(
        flops=2 * M * N * K,
        transcendentals=0,
        bytes_accessed=M * K * x.dtype.itemsize + K * N * w.dtype.itemsize
        + M * N * out_dtype.itemsize,
    )
    return pl.pallas_call(
        functools.partial(_matmul_kernel, compute_dtype=compute_dtype),
        out_shape=jax.ShapeDtypeStruct((M, N), out_dtype),
        grid_spec=pltpu.PrefetchScalarGridSpec(
            num_scalar_prefetch=0,
            grid=grid,
            in_specs=[
                pl.BlockSpec((tm, tk), lambda i, j, k: (i, k)),
                pl.BlockSpec((tk, tn), lambda i, j, k: (k, j)),
            ],
            out_specs=pl.BlockSpec((tm, tn), lambda i, j, k: (i, j)),
            scratch_shapes=[pltpu.VMEM((tm, tn), jnp.float32)],
        ),
        compiler_params=pltpu.CompilerParams(
            dimension_semantics=("parallel", "parallel", "arbitrary"),
            vmem_limit_bytes=_VMEM_LIMIT,
        ),
        cost_estimate=cost,
    )(x, w)


# ---------------------------------------------------------------------------
# Kernel 2: fused Q/K/V projection — one grid, shared x tile, three weights,
#           three outputs (self-attention path: x_q is x_k is x_v).
# ---------------------------------------------------------------------------
def _qkv_kernel(x_ref, wq_ref, wk_ref, wv_ref, q_ref, k_ref, v_ref,
                qacc, kacc, vacc, *, compute_dtype):
    @pl.when(pl.program_id(2) == 0)
    def _():
        qacc[...] = jnp.zeros_like(qacc)
        kacc[...] = jnp.zeros_like(kacc)
        vacc[...] = jnp.zeros_like(vacc)

    x = x_ref[...].astype(compute_dtype)  # shared activation tile: read+cast once
    qacc[...] += jnp.dot(x, wq_ref[...].astype(compute_dtype),
                         preferred_element_type=jnp.float32)
    kacc[...] += jnp.dot(x, wk_ref[...].astype(compute_dtype),
                         preferred_element_type=jnp.float32)
    vacc[...] += jnp.dot(x, wv_ref[...].astype(compute_dtype),
                         preferred_element_type=jnp.float32)

    @pl.when(pl.program_id(2) == pl.num_programs(2) - 1)
    def _():
        q_ref[...] = qacc[...].astype(q_ref.dtype)
        k_ref[...] = kacc[...].astype(k_ref.dtype)
        v_ref[...] = vacc[...].astype(v_ref.dtype)


def pallas_qkv_proj(x, wq, wk, wv, *, compute_dtype=jnp.bfloat16,
                    out_dtype=None, tm=512, tn=512, tk=512):
    """x: (M, K); wq/wk/wv: (K, N) -> three (M, N) outputs in one pallas_call."""
    M, K = x.shape
    N = wq.shape[1]
    assert wq.shape == (K, N) and wk.shape == (K, N) and wv.shape == (K, N)
    out_dtype = np.dtype(out_dtype if out_dtype is not None else x.dtype)
    tm = _pick_tile(M, tm, align=8)
    tn = _pick_tile(N, tn, align=128)
    tk = _pick_tile(K, tk, align=128)
    grid = (M // tm, N // tn, K // tk)

    w_spec = pl.BlockSpec((tk, tn), lambda i, j, k: (k, j))
    o_spec = pl.BlockSpec((tm, tn), lambda i, j, k: (i, j))
    out_sd = jax.ShapeDtypeStruct((M, N), out_dtype)

    cost = pl.CostEstimate(
        flops=3 * 2 * M * N * K,
        transcendentals=0,
        bytes_accessed=M * K * x.dtype.itemsize + 3 * K * N * wq.dtype.itemsize
        + 3 * M * N * out_dtype.itemsize,
    )
    return pl.pallas_call(
        functools.partial(_qkv_kernel, compute_dtype=compute_dtype),
        out_shape=(out_sd, out_sd, out_sd),
        grid_spec=pltpu.PrefetchScalarGridSpec(
            num_scalar_prefetch=0,
            grid=grid,
            in_specs=[
                pl.BlockSpec((tm, tk), lambda i, j, k: (i, k)),
                w_spec, w_spec, w_spec,
            ],
            out_specs=(o_spec, o_spec, o_spec),
            scratch_shapes=[
                pltpu.VMEM((tm, tn), jnp.float32),
                pltpu.VMEM((tm, tn), jnp.float32),
                pltpu.VMEM((tm, tn), jnp.float32),
            ],
        ),
        compiler_params=pltpu.CompilerParams(
            dimension_semantics=("parallel", "parallel", "arbitrary"),
            vmem_limit_bytes=_VMEM_LIMIT,
        ),
        cost_estimate=cost,
    )(x, wq, wk, wv)


# ---------------------------------------------------------------------------
# Kernel 3: attention.  grid=(B, H//G, q_tiles); each step processes a group
# of G heads for one q-row tile.  q/k/v arrive head-interleaved (B, S, H*hd);
# the BlockSpec slices out the group's G*hd lanes (DMA-side slicing), and ctx
# is written back head-by-head into the same layout.
# ---------------------------------------------------------------------------
def _attn_body(q_blk, k_blk, v_blk, mask, scores_ref, ctx_ref, *,
               g_heads, head_dim, scale, compute_dtype, approx_recip):
    # q_blk: (tq, G*hd), k_blk/v_blk: (S_kv, G*hd), mask: (tq, S_kv) or None
    q = (q_blk * scale).astype(compute_dtype)   # fold 1/sqrt(hd) into q once
    k = k_blk.astype(compute_dtype)
    v = v_blk.astype(compute_dtype)

    # TODO(synk): when head_dim < 128 the intra-group per-head slices below are
    # sub-lane-tile aligned; a batched dot_general over the head axis would
    # avoid the masked loads at the cost of an in-kernel reshape/transpose.
    for h in range(g_heads):                    # static unroll over grouped heads
        lo = h * head_dim
        q_h = q[:, lo:lo + head_dim]            # (tq, hd)
        k_h = k[:, lo:lo + head_dim]            # (S_kv, hd)
        v_h = v[:, lo:lo + head_dim]            # (S_kv, hd)

        # Contract the last dims of q and k directly on the MXU — no explicit
        # k.T (avoids an XLU transpose / VMEM relayout).  f32 accumulation.
        s = lax.dot_general(
            q_h, k_h, (((1,), (1,)), ((), ())),
            preferred_element_type=jnp.float32,
        )
        if mask is not None:
            s = s + mask

        # numerically-stable softmax (matches F.softmax(..., dim=-1).float())
        s = s - jnp.max(s, axis=-1, keepdims=True)
        e = jnp.exp(s)
        denom = jnp.sum(e, axis=-1, keepdims=True)
        p = e * pl.reciprocal(denom, approx=approx_recip)

        scores_ref[0, h] = p.astype(scores_ref.dtype)
        ctx_h = jnp.dot(p.astype(compute_dtype), v_h,
                        preferred_element_type=jnp.float32)
        # incremental per-head writeback: bounds vreg live ranges, uses the
        # otherwise-idle vst slot (no trailing concat / relayout).
        ctx_ref[0, :, lo:lo + head_dim] = ctx_h.astype(ctx_ref.dtype)


def _attn_kernel_masked(q_ref, k_ref, v_ref, mask_ref, scores_ref, ctx_ref, **kw):
    _attn_body(q_ref[0], k_ref[0], v_ref[0], mask_ref[...], scores_ref, ctx_ref, **kw)


def _attn_kernel_nomask(q_ref, k_ref, v_ref, scores_ref, ctx_ref, **kw):
    _attn_body(q_ref[0], k_ref[0], v_ref[0], None, scores_ref, ctx_ref, **kw)


def pallas_attention(xq, xk, xv, mask, n_heads, head_dim, *,
                     compute_dtype=jnp.bfloat16, tq_target=128,
                     heads_per_step=None):
    """xq: (B, S_q, H*hd); xk/xv: (B, S_kv, H*hd); mask: (S_q, S_kv) additive
    or None.  Returns (scores (B,H,S_q,S_kv) f32, ctx (B,S_q,H*hd))."""
    B, S_q, D = xq.shape
    _, S_kv, D_kv = xk.shape
    assert D == n_heads * head_dim and D_kv == D and xv.shape == xk.shape

    scale = 1.0 / math.sqrt(head_dim)
    tq = _pick_tile(S_q, tq_target, align=8)
    G = heads_per_step if heads_per_step is not None else _pick_head_group(n_heads, head_dim)
    gd = G * head_dim
    grid = (B, n_heads // G, S_q // tq)

    q_spec = pl.BlockSpec((1, tq, gd), lambda b, g, i: (b, i, g))
    kv_spec = pl.BlockSpec((1, S_kv, gd), lambda b, g, i: (b, 0, g))
    # lane-dense scores rows: last dim is the complete S_kv extent
    scores_spec = pl.BlockSpec((1, G, tq, S_kv), lambda b, g, i: (b, g, i, 0))
    ctx_spec = pl.BlockSpec((1, tq, gd), lambda b, g, i: (b, i, g))

    ctx_dtype = np.dtype(compute_dtype)
    out_shape = (
        jax.ShapeDtypeStruct((B, n_heads, S_q, S_kv), jnp.float32),  # scores (f32 per reference)
        jax.ShapeDtypeStruct((B, S_q, D), ctx_dtype),                # context
    )
    cost = pl.CostEstimate(
        flops=4 * B * n_heads * S_q * S_kv * head_dim,   # q@k^T + p@v
        transcendentals=B * n_heads * S_q * S_kv,
        bytes_accessed=(B * S_q * D + 2 * B * S_kv * D) * xq.dtype.itemsize
        + B * n_heads * S_q * S_kv * 4
        + B * S_q * D * ctx_dtype.itemsize
        + (S_q * S_kv * 4 if mask is not None else 0),
    )
    cparams = pltpu.CompilerParams(
        dimension_semantics=("parallel", "parallel", "parallel"),
        vmem_limit_bytes=_VMEM_LIMIT,
    )
    kw = dict(
        g_heads=G, head_dim=head_dim, scale=scale, compute_dtype=compute_dtype,
        approx_recip=(np.dtype(compute_dtype) != np.dtype(jnp.float32)),
    )

    if mask is None:
        kernel = functools.partial(_attn_kernel_nomask, **kw)
        return pl.pallas_call(
            kernel,
            out_shape=out_shape,
            grid_spec=pltpu.PrefetchScalarGridSpec(
                num_scalar_prefetch=0,
                grid=grid,
                in_specs=[q_spec, kv_spec, kv_spec],
                out_specs=(scores_spec, ctx_spec),
            ),
            compiler_params=cparams,
            cost_estimate=cost,
        )(xq, xk, xv)

    # TODO(synk): only a 2-D (S_q, S_kv) additive mask (broadcast over batch and
    # heads) is supported; per-batch / per-head masks would need a grid-indexed
    # mask BlockSpec.
    mask = jnp.broadcast_to(jnp.asarray(mask, jnp.float32), (S_q, S_kv))
    mask_spec = pl.BlockSpec((tq, S_kv), lambda b, g, i: (i, 0))
    kernel = functools.partial(_attn_kernel_masked, **kw)
    return pl.pallas_call(
        kernel,
        out_shape=out_shape,
        grid_spec=pltpu.PrefetchScalarGridSpec(
            num_scalar_prefetch=0,
            grid=grid,
            in_specs=[q_spec, kv_spec, kv_spec, mask_spec],
            out_specs=(scores_spec, ctx_spec),
        ),
        compiler_params=cparams,
        cost_estimate=cost,
    )(xq, xk, xv, mask)


# ---------------------------------------------------------------------------
# Module wrapper (glue in plain JAX, hot paths in Pallas; no HBM transposes)
# ---------------------------------------------------------------------------
class MultiHeadAttentionPallas:
    def __init__(self, dim, n_heads, key, compute_dtype=jnp.bfloat16):
        self.dim = dim
        self.n_heads = n_heads
        self.n_kv_heads = n_heads
        self.n_rep = 1                       # repeat_kv is the identity
        self.head_dim = dim // n_heads
        self.compute_dtype = np.dtype(compute_dtype)

        k1, k2, k3, k4 = jax.random.split(key, 4)
        bound = 1.0 / math.sqrt(dim)
        # f32 master weights stored as (in_dim, out_dim) (transposed vs nn.Linear)
        self.wq = jax.random.uniform(k1, (dim, n_heads * self.head_dim),
                                     jnp.float32, -bound, bound)
        self.wk = jax.random.uniform(k2, (dim, self.n_kv_heads * self.head_dim),
                                     jnp.float32, -bound, bound)
        self.wv = jax.random.uniform(k3, (dim, self.n_kv_heads * self.head_dim),
                                     jnp.float32, -bound, bound)
        self.wo = jax.random.uniform(k4, (n_heads * self.head_dim, dim),
                                     jnp.float32, -bound, bound)
        # compute-dtype copies for the Pallas path (halves weight DMA for bf16;
        # identical math to casting the f32 tiles in-kernel).
        cd = self.compute_dtype
        self.wq_c = self.wq.astype(cd)
        self.wk_c = self.wk.astype(cd)
        self.wv_c = self.wv.astype(cd)
        self.wo_c = self.wo.astype(cd)

    def __call__(self, x_q, x_k, x_v, freqs_complex, mask, rope):
        # freqs_complex / rope are unused in the reference forward (no RoPE).
        B, S_q, D = x_q.shape
        H, hd = self.n_heads, self.head_dim
        cd = self.compute_dtype

        if (x_k is x_q) and (x_v is x_q):
            # self-attention: fused QKV projection (single shared read of x)
            q2, k2, v2 = pallas_qkv_proj(
                x_q.reshape(B * S_q, D), self.wq_c, self.wk_c, self.wv_c,
                compute_dtype=cd, out_dtype=cd)
            xq = q2.reshape(B, S_q, H * hd)
            xk = k2.reshape(B, S_q, H * hd)
            xv = v2.reshape(B, S_q, H * hd)
        else:
            S_kv = x_k.shape[1]
            xq = pallas_linear(x_q.reshape(B * S_q, D), self.wq_c,
                               compute_dtype=cd, out_dtype=cd).reshape(B, S_q, H * hd)
            xk = pallas_linear(x_k.reshape(B * S_kv, D), self.wk_c,
                               compute_dtype=cd, out_dtype=cd).reshape(B, S_kv, H * hd)
            xv = pallas_linear(x_v.reshape(B * S_kv, D), self.wv_c,
                               compute_dtype=cd, out_dtype=cd).reshape(B, S_kv, H * hd)

        # attention consumes / produces the head-interleaved (B, S, H*hd)
        # layout, so no (B,S,H,hd)<->(B,H,S,hd) transposes are needed.
        scores, ctx = pallas_attention(xq, xk, xv, mask, H, hd, compute_dtype=cd)

        out = pallas_linear(ctx.reshape(B * S_q, H * hd), self.wo_c,
                            compute_dtype=cd, out_dtype=x_q.dtype).reshape(B, S_q, D)
        return out, scores


# ---------------------------------------------------------------------------
# Pure-JAX reference (f32) for the sanity check
# ---------------------------------------------------------------------------
def reference_forward(mha, x_q, x_k, x_v, mask):
    B, S_q, D = x_q.shape
    S_kv = x_k.shape[1]
    H, hd = mha.n_heads, mha.head_dim
    xq = (x_q @ mha.wq).reshape(B, S_q, H, hd).transpose(0, 2, 1, 3)
    xk = (x_k @ mha.wk).reshape(B, S_kv, H, hd).transpose(0, 2, 1, 3)
    xv = (x_v @ mha.wv).reshape(B, S_kv, H, hd).transpose(0, 2, 1, 3)
    s = jnp.einsum("bhqd,bhkd->bhqk", xq, xk) / math.sqrt(hd)
    if mask is not None:
        s = s + mask
    p = jax.nn.softmax(s.astype(jnp.float32), axis=-1)
    ctx = jnp.einsum("bhqk,bhkd->bhqd", p, xv)
    ctx = ctx.transpose(0, 2, 1, 3).reshape(B, S_q, H * hd)
    return ctx @ mha.wo, p


if __name__ == "__main__":
    B, S, dim, n_heads = 2, 8, 32, 4

    key = jax.random.PRNGKey(0)
    kw_, kq_, kk_, kv_ = jax.random.split(key, 4)

    mha_bf16 = MultiHeadAttentionPallas(dim, n_heads, kw_)                   # bf16 MXU path
    mha_f32 = MultiHeadAttentionPallas(dim, n_heads, kw_,
                                       compute_dtype=jnp.float32)            # exact path

    x = jax.random.normal(kq_, (B, S, dim), jnp.float32)
    mask = jnp.where(jnp.tril(jnp.ones((S, S), jnp.bool_)), 0.0, -1e9).astype(jnp.float32)

    # ---- Case 1: self-attention + causal mask, bf16 compute ---------------
    out1, scores1 = mha_bf16(x, x, x, None, mask, False)
    jax.block_until_ready((out1, scores1))
    ref_out1, ref_scores1 = reference_forward(mha_bf16, x, x, x, mask)
    assert out1.shape == (B, S, dim)
    assert scores1.shape == (B, n_heads, S, S)
    assert jnp.allclose(out1, ref_out1, atol=3e-2, rtol=3e-2)
    assert jnp.allclose(scores1, ref_scores1, atol=3e-2, rtol=3e-2)

    # ---- Case 2: cross-attention, no mask, different kv length, bf16 ------
    S_kv = 16
    x_k = jax.random.normal(kk_, (B, S_kv, dim), jnp.float32)
    x_v = jax.random.normal(kv_, (B, S_kv, dim), jnp.float32)
    out2, scores2 = mha_bf16(x, x_k, x_v, None, None, False)
    jax.block_until_ready((out2, scores2))
    ref_out2, ref_scores2 = reference_forward(mha_bf16, x, x_k, x_v, None)
    assert out2.shape == (B, S, dim)
    assert scores2.shape == (B, n_heads, S, S_kv)
    assert jnp.allclose(out2, ref_out2, atol=3e-2, rtol=3e-2)
    assert jnp.allclose(scores2, ref_scores2, atol=3e-2, rtol=3e-2)

    # ---- Case 3: f32 compute path, exact parity with the reference --------
    out3, scores3 = mha_f32(x, x, x, None, mask, False)
    jax.block_until_ready((out3, scores3))
    ref_out3, ref_scores3 = reference_forward(mha_f32, x, x, x, mask)
    assert jnp.allclose(out3, ref_out3, atol=1e-5, rtol=1e-5)
    assert jnp.allclose(scores3, ref_scores3, atol=1e-5, rtol=1e-5)

    print("KERNEL_OK")
</pallas_src>

<mosaic_0001>
module attributes {stable_mosaic.version = 11 : i64} {
  func.func @_qkv_kernel(%arg0: i32, %arg1: i32, %arg2: i32, %arg3: memref<16x32xf32, #tpu.memory_space<vmem>>, %arg4: memref<32x32xbf16, #tpu.memory_space<vmem>>, %arg5: memref<32x32xbf16, #tpu.memory_space<vmem>>, %arg6: memref<32x32xbf16, #tpu.memory_space<vmem>>, %arg7: memref<16x32xbf16, #tpu.memory_space<vmem>>, %arg8: memref<16x32xbf16, #tpu.memory_space<vmem>>, %arg9: memref<16x32xbf16, #tpu.memory_space<vmem>>, %arg10: memref<16x32xf32, #tpu.memory_space<vmem>>, %arg11: memref<16x32xf32, #tpu.memory_space<vmem>>, %arg12: memref<16x32xf32, #tpu.memory_space<vmem>>) attributes {dimension_semantics = [#tpu.dimension_semantics<parallel>, #tpu.dimension_semantics<parallel>, #tpu.dimension_semantics<arbitrary>], iteration_bounds = array<i64: 1, 1, 1>, scalar_prefetch = 0 : i64, scratch_operands = 3 : i64, tpu.core_type = #tpu.core_type<tc>, window_params = [{transform_indices = @transform_0, window_bounds = array<i64: 16, 32>}, {transform_indices = @transform_1, window_bounds = array<i64: 32, 32>}, {transform_indices = @transform_2, window_bounds = array<i64: 32, 32>}, {transform_indices = @transform_3, window_bounds = array<i64: 32, 32>}, {transform_indices = @transform_4, window_bounds = array<i64: 16, 32>}, {transform_indices = @transform_5, window_bounds = array<i64: 16, 32>}, {transform_indices = @transform_6, window_bounds = array<i64: 16, 32>}]} {
    %c0_i32 = arith.constant 0 : i32
    %0 = arith.cmpi eq, %arg2, %c0_i32 : i32
    %1 = arith.extui %0 : i1 to i32
    %c0_i32_0 = arith.constant 0 : i32
    %2 = arith.cmpi ne, %1, %c0_i32_0 : i32
    scf.if %2 {
      %cst_24 = arith.constant 0.000000e+00 : f32
      %23 = vector.broadcast %cst_24 : f32 to vector<16x32xf32>
      %c0_25 = arith.constant 0 : index
      %c0_26 = arith.constant 0 : index
      %24 = vector.load %arg10[%c0_25, %c0_26] : memref<16x32xf32, #tpu.memory_space<vmem>>, vector<16x32xf32>
      tpu.vector_store %arg10[%c0_25, %c0_26], %23 {strides = array<i32>} : memref<16x32xf32, #tpu.memory_space<vmem>>, vector<16x32xf32>,
      %cst_27 = arith.constant 0.000000e+00 : f32
      %25 = vector.broadcast %cst_27 : f32 to vector<16x32xf32>
      %c0_28 = arith.constant 0 : index
      %c0_29 = arith.constant 0 : index
      %26 = vector.load %arg11[%c0_28, %c0_29] : memref<16x32xf32, #tpu.memory_space<vmem>>, vector<16x32xf32>
      tpu.vector_store %arg11[%c0_28, %c0_29], %25 {strides = array<i32>} : memref<16x32xf32, #tpu.memory_space<vmem>>, vector<16x32xf32>,
      %cst_30 = arith.constant 0.000000e+00 : f32
      %27 = vector.broadcast %cst_30 : f32 to vector<16x32xf32>
      %c0_31 = arith.constant 0 : index
      %c0_32 = arith.constant 0 : index
      %28 = vector.load %arg12[%c0_31, %c0_32] : memref<16x32xf32, #tpu.memory_space<vmem>>, vector<16x32xf32>
      tpu.vector_store %arg12[%c0_31, %c0_32], %27 {strides = array<i32>} : memref<16x32xf32, #tpu.memory_space<vmem>>, vector<16x32xf32>,
    } else {
    }
    %c0 = arith.constant 0 : index
    %c0_1 = arith.constant 0 : index
    %3 = vector.load %arg3[%c0, %c0_1] : memref<16x32xf32, #tpu.memory_space<vmem>>, vector<16x32xf32>
    %4 = arith.truncf %3 : vector<16x32xf32> to vector<16x32xbf16>
    %c0_2 = arith.constant 0 : index
    %c0_3 = arith.constant 0 : index
    %5 = vector.load %arg10[%c0_2, %c0_3] : memref<16x32xf32, #tpu.memory_space<vmem>>, vector<16x32xf32>
    %c0_4 = arith.constant 0 : index
    %c0_5 = arith.constant 0 : index
    %6 = vector.load %arg4[%c0_4, %c0_5] : memref<32x32xbf16, #tpu.memory_space<vmem>>, vector<32x32xbf16>
    %cst = arith.constant dense<0.000000e+00> : vector<16x32xf32>
    %7 = tpu.matmul %4, %6, %cst {dimension_numbers = #tpu.dot_dimension_numbers<[1], [0], [0], [1], [0, 0, 1, 1], [], []>} : vector<16x32xbf16>, vector<32x32xbf16>, vector<16x32xf32> -> vector<16x32xf32>
    %8 = arith.addf %5, %7 : vector<16x32xf32>
    %c0_6 = arith.constant 0 : index
    %c0_7 = arith.constant 0 : index
    %9 = vector.load %arg10[%c0_6, %c0_7] : memref<16x32xf32, #tpu.memory_space<vmem>>, vector<16x32xf32>
    tpu.vector_store %arg10[%c0_6, %c0_7], %8 {strides = array<i32>} : memref<16x32xf32, #tpu.memory_space<vmem>>, vector<16x32xf32>,
    %c0_8 = arith.constant 0 : index
    %c0_9 = arith.constant 0 : index
    %10 = vector.load %arg11[%c0_8, %c0_9] : memref<16x32xf32, #tpu.memory_space<vmem>>, vector<16x32xf32>
    %c0_10 = arith.constant 0 : index
    %c0_11 = arith.constant 0 : index
    %11 = vector.load %arg5[%c0_10, %c0_11] : memref<32x32xbf16, #tpu.memory_space<vmem>>, vector<32x32xbf16>
    %cst_12 = arith.constant dense<0.000000e+00> : vector<16x32xf32>
    %12 = tpu.matmul %4, %11, %cst_12 {dimension_numbers = #tpu.dot_dimension_numbers<[1], [0], [0], [1], [0, 0, 1, 1], [], []>} : vector<16x32xbf16>, vector<32x32xbf16>, vector<16x32xf32> -> vector<16x32xf32>
    %13 = arith.addf %10, %12 : vector<16x32xf32>
    %c0_13 = arith.constant 0 : index
    %c0_14 = arith.constant 0 : index
    %14 = vector.load %arg11[%c0_13, %c0_14] : memref<16x32xf32, #tpu.memory_space<vmem>>, vector<16x32xf32>
    tpu.vector_store %arg11[%c0_13, %c0_14], %13 {strides = array<i32>} : memref<16x32xf32, #tpu.memory_space<vmem>>, vector<16x32xf32>,
    %c0_15 = arith.constant 0 : index
    %c0_16 = arith.constant 0 : index
    %15 = vector.load %arg12[%c0_15, %c0_16] : memref<16x32xf32, #tpu.memory_space<vmem>>, vector<16x32xf32>
    %c0_17 = arith.constant 0 : index
    %c0_18 = arith.constant 0 : index
    %16 = vector.load %arg6[%c0_17, %c0_18] : memref<32x32xbf16, #tpu.memory_space<vmem>>, vector<32x32xbf16>
    %cst_19 = arith.constant dense<0.000000e+00> : vector<16x32xf32>
    %17 = tpu.matmul %4, %16, %cst_19 {dimension_numbers = #tpu.dot_dimension_numbers<[1], [0], [0], [1], [0, 0, 1, 1], [], []>} : vector<16x32xbf16>, vector<32x32xbf16>, vector<16x32xf32> -> vector<16x32xf32>
    %18 = arith.addf %15, %17 : vector<16x32xf32>
    %c0_20 = arith.constant 0 : index
    %c0_21 = arith.constant 0 : index
    %19 = vector.load %arg12[%c0_20, %c0_21] : memref<16x32xf32, #tpu.memory_space<vmem>>, vector<16x32xf32>
    tpu.vector_store %arg12[%c0_20, %c0_21], %18 {strides = array<i32>} : memref<16x32xf32, #tpu.memory_space<vmem>>, vector<16x32xf32>,
    %c0_i32_22 = arith.constant 0 : i32
    %20 = arith.cmpi eq, %arg2, %c0_i32_22 : i32
    %21 = arith.extui %20 : i1 to i32
    %c0_i32_23 = arith.constant 0 : i32
    %22 = arith.cmpi ne, %21, %c0_i32_23 : i32
    scf.if %22 {
      %c0_24 = arith.constant 0 : index
      %c0_25 = arith.constant 0 : index
      %23 = vector.load %arg10[%c0_24, %c0_25] : memref<16x32xf32, #tpu.memory_space<vmem>>, vector<16x32xf32>
      %24 = arith.truncf %23 : vector<16x32xf32> to vector<16x32xbf16>
      %c0_26 = arith.constant 0 : index
      %c0_27 = arith.constant 0 : index
      %25 = vector.load %arg7[%c0_26, %c0_27] : memref<16x32xbf16, #tpu.memory_space<vmem>>, vector<16x32xbf16>
      tpu.vector_store %arg7[%c0_26, %c0_27], %24 {strides = array<i32>} : memref<16x32xbf16, #tpu.memory_space<vmem>>, vector<16x32xbf16>,
      %c0_28 = arith.constant 0 : index
      %c0_29 = arith.constant 0 : index
      %26 = vector.load %arg11[%c0_28, %c0_29] : memref<16x32xf32, #tpu.memory_space<vmem>>, vector<16x32xf32>
      %27 = arith.truncf %26 : vector<16x32xf32> to vector<16x32xbf16>
      %c0_30 = arith.constant 0 : index
      %c0_31 = arith.constant 0 : index
      %28 = vector.load %arg8[%c0_30, %c0_31] : memref<16x32xbf16, #tpu.memory_space<vmem>>, vector<16x32xbf16>
      tpu.vector_store %arg8[%c0_30, %c0_31], %27 {strides = array<i32>} : memref<16x32xbf16, #tpu.memory_space<vmem>>, vector<16x32xbf16>,
      %c0_32 = arith.constant 0 : index
      %c0_33 = arith.constant 0 : index
      %29 = vector.load %arg12[%c0_32, %c0_33] : memref<16x32xf32, #tpu.memory_space<vmem>>, vector<16x32xf32>
      %30 = arith.truncf %29 : vector<16x32xf32> to vector<16x32xbf16>
      %c0_34 = arith.constant 0 : index
      %c0_35 = arith.constant 0 : index
      %31 = vector.load %arg9[%c0_34, %c0_35] : memref<16x32xbf16, #tpu.memory_space<vmem>>, vector<16x32xbf16>
      tpu.vector_store %arg9[%c0_34, %c0_35], %30 {strides = array<i32>} : memref<16x32xbf16, #tpu.memory_space<vmem>>, vector<16x32xbf16>,
    } else {
    }
    return
  }
  func.func @transform_0(%arg0: i32, %arg1: i32, %arg2: i32) -> (i32, i32) {
    %c0_i32 = arith.constant 0 : i32
    return %arg0, %arg2 : i32, i32
  }
  func.func @transform_1(%arg0: i32, %arg1: i32, %arg2: i32) -> (i32, i32) {
    %c0_i32 = arith.constant 0 : i32
    return %arg2, %arg1 : i32, i32
  }
  func.func @transform_2(%arg0: i32, %arg1: i32, %arg2: i32) -> (i32, i32) {
    %c0_i32 = arith.constant 0 : i32
    return %arg2, %arg1 : i32, i32
  }
  func.func @transform_3(%arg0: i32, %arg1: i32, %arg2: i32) -> (i32, i32) {
    %c0_i32 = arith.constant 0 : i32
    return %arg2, %arg1 : i32, i32
  }
  func.func @transform_4(%arg0: i32, %arg1: i32, %arg2: i32) -> (i32, i32) {
    %c0_i32 = arith.constant 0 : i32
    return %arg0, %arg1 : i32, i32
  }
  func.func @transform_5(%arg0: i32, %arg1: i32, %arg2: i32) -> (i32, i32) {
    %c0_i32 = arith.constant 0 : i32
    return %arg0, %arg1 : i32, i32
  }
  func.func @transform_6(%arg0: i32, %arg1: i32, %arg2: i32) -> (i32, i32) {
    %c0_i32 = arith.constant 0 : i32
    return %arg0, %arg1 : i32, i32
  }
}

</mosaic_0001>

<llo_original>
// kernel: tpu_custom_call.1
$region0: #{tpu_custom_call.1}
  #allocation0 [shape = 'u32[]', space=smem, size = 0x4, offset = 0x4, fixed_abs, tag = 'smem constant byte address 0x4 - core index']
  #allocation1 [shape = 'u32[144,128]{1,0:T(1,128)}', space=vmem, size = 0x12000, scoped, tag = 'internal scratch']
  #allocation2 [shape = 'f32[16,32]{1,0:T(8,128)}', space=vmem, size = 0x2000, scoped, tag = 'scratch operand']
  #allocation3 [shape = 'f32[16,32]{1,0:T(8,128)}', space=vmem, size = 0x2000, scoped, tag = 'scratch operand']
  #allocation4 [shape = 'f32[16,32]{1,0:T(8,128)}', space=vmem, size = 0x2000, scoped, tag = 'scratch operand']
  %s0 = inlined_call_operand.hbm [shape: f32[16,32], index: 0, kind: input, shape index: {}]
  %s1 = inlined_call_operand.hbm [shape: bf16[32,32], index: 1, kind: input, shape index: {}]
  %s2 = inlined_call_operand.hbm [shape: bf16[32,32], index: 2, kind: input, shape index: {}]
  %s3 = inlined_call_operand.hbm [shape: bf16[32,32], index: 3, kind: input, shape index: {}]
  %s4 = inlined_call_operand.hbm [shape: bf16[16,32], index: 4, kind: output, shape index: {0}]
  %s5 = inlined_call_operand.hbm [shape: bf16[16,32], index: 5, kind: output, shape index: {1}]
  %s6 = inlined_call_operand.hbm [shape: bf16[16,32], index: 6, kind: output, shape index: {2}]
  %7 = xla_tuple %s4, %s5, %s6
  %s8 = sld [smem:[#allocation0]]
  $region66: #{tpu_custom_call.1} parent=0
    _
  %s10 = ssub.s32 1, %s8
  %s11 = scalar_select 0, %s10, %s8
  $region1: #{tpu_custom_call.1} parent=0
    #allocation5 [shape = 'u8[8192]{0}', space=vmem, size = 0x2000, scoped, tag = 'input window, operand 0, single buffered']
    #allocation6 [shape = 's32[1]{0}', space=sflag, size = 0x4, scoped, tag = 'scoped memory for tpu_custom_call.1']
    #allocation7 [shape = 's32[1]{0}', space=sflag, size = 0x4, scoped, tag = 'scoped memory for tpu_custom_call.1']
    #allocation8 [shape = 'u8[8192]{0}', space=vmem, size = 0x2000, scoped, tag = 'input window, operand 1, single buffered']
    #allocation9 [shape = 's32[1]{0}', space=sflag, size = 0x4, scoped, tag = 'scoped memory for tpu_custom_call.1']
    #allocation10 [shape = 'u8[8192]{0}', space=vmem, size = 0x2000, scoped, tag = 'input window, operand 2, single buffered']
    #allocation11 [shape = 'u8[8192]{0}', space=vmem, size = 0x2000, scoped, tag = 'input window, operand 3, single buffered']
    #allocation12 [shape = 's32[1]{0}', space=sflag, size = 0x4, scoped, tag = 'scoped memory for tpu_custom_call.1']
    #allocation13 [shape = 'u8[4096]{0}', space=vmem, size = 0x1000, scoped, tag = 'output window, operand 0, single buffered']
    #allocation14 [shape = 'u8[4096]{0}', space=vmem, size = 0x1000, scoped, tag = 'output window, operand 1, single buffered']
    #allocation15 [shape = 's32[1]{0}', space=sflag, size = 0x4, scoped, tag = 'scoped memory for tpu_custom_call.1']
    #allocation16 [shape = 'u8[4096]{0}', space=vmem, size = 0x1000, scoped, tag = 'output window, operand 2, single buffered']
    %12 = vsyncpa [#allocation6], 0
    %13 = vsyncpa [#allocation9], 0
    %14 = vsyncpa [#allocation12], 0
    %15 = vsyncpa [#allocation7], 0
    %16 = vsyncpa [#allocation15], 0
    // Predicated region
    $region2: #{tpu_custom_call.1} parent=1 // pred_check
      _
    $region3: #{tpu_custom_call.1} parent=1 // pred_check_branch
      %18 = sbr.rel (0) target = $region5
    $region4: #{tpu_custom_call.1} parent=1 // pred_region
      %s20 = ssub.s32 256, 256
      %21 = vsyncadd [#allocation6], %s20
      %s22 = sshll.u32 [#allocation5], 4
      %s23 = int_to_ptr.vmem [resolvable:$true] %s22
      %28 = dma.hbm_to_vmem [thread:$0]  %s0, 256, %s23, [#allocation6], 128, 128, 8
    $region5: #{tpu_custom_call.1} parent=1 // pred_fallthru
      _
    // Predicated region
    $region6: #{tpu_custom_call.1} parent=1 // pred_check
      _
    $region7: #{tpu_custom_call.1} parent=1 // pred_check_branch
      %30 = sbr.rel (0) target = $region9
    $region8: #{tpu_custom_call.1} parent=1 // pred_region
      %s32 = ssub.s32 256, 256
      %33 = vsyncadd [#allocation9], %s32
      %s34 = sshll.u32 [#allocation8], 4
      %s35 = int_to_ptr.vmem [resolvable:$true] %s34
      %40 = dma.hbm_to_vmem [thread:$0]  %s1, 256, %s35, [#allocation9], 64, 64, 4
    $region9: #{tpu_custom_call.1} parent=1 // pred_fallthru
      _
    // Predicated region
    $region10: #{tpu_custom_call.1} parent=1 // pred_check
      _
    $region11: #{tpu_custom_call.1} parent=1 // pred_check_branch
      %42 = sbr.rel (0) target = $region13
    $region12: #{tpu_custom_call.1} parent=1 // pred_region
      %s44 = ssub.s32 256, 256
      %45 = vsyncadd [#allocation9], %s44
      %s46 = sshll.u32 [#allocation10], 4
      %s47 = int_to_ptr.vmem [resolvable:$true] %s46
      %52 = dma.hbm_to_vmem [thread:$0]  %s2, 256, %s47, [#allocation9], 64, 64, 4
    $region13: #{tpu_custom_call.1} parent=1 // pred_fallthru
      _
    // Predicated region
    $region14: #{tpu_custom_call.1} parent=1 // pred_check
      _
    $region15: #{tpu_custom_call.1} parent=1 // pred_check_branch
      %54 = sbr.rel (0) target = $region17
    $region16: #{tpu_custom_call.1} parent=1 // pred_region
      %s56 = ssub.s32 256, 256
      %57 = vsyncadd [#allocation12], %s56
      %s58 = sshll.u32 [#allocation11], 4
      %s59 = int_to_ptr.vmem [resolvable:$true] %s58
      %64 = dma.hbm_to_vmem [thread:$0]  %s3, 256, %s59, [#allocation12], 64, 64, 4
    $region17: #{tpu_custom_call.1} parent=1 // pred_fallthru
      _
    // Predicated region
    $region18: #{tpu_custom_call.1} parent=1 // pred_check
      _
    $region19: #{tpu_custom_call.1} parent=1 // pred_check_branch
      %66 = sbr.rel (0) target = $region21
    $region20: #{tpu_custom_call.1} parent=1 // pred_region
      %67 = dma.done [#allocation6], 256
    $region21: #{tpu_custom_call.1} parent=1 // pred_fallthru
      _
    // Predicated region
    $region22: #{tpu_custom_call.1} parent=1 // pred_check
      _
    $region23: #{tpu_custom_call.1} parent=1 // pred_check_branch
      %69 = sbr.rel (0) target = $region25
    $region24: #{tpu_custom_call.1} parent=1 // pred_region
      %70 = dma.done [#allocation9], 256
    $region25: #{tpu_custom_call.1} parent=1 // pred_fallthru
      _
    // Predicated region
    $region26: #{tpu_custom_call.1} parent=1 // pred_check
      _
    $region27: #{tpu_custom_call.1} parent=1 // pred_check_branch
      %72 = sbr.rel (0) target = $region29
    $region28: #{tpu_custom_call.1} parent=1 // pred_region
      %73 = dma.done [#allocation9], 256
    $region29: #{tpu_custom_call.1} parent=1 // pred_fallthru
      _
    // Predicated region
    $region30: #{tpu_custom_call.1} parent=1 // pred_check
      _
    $region31: #{tpu_custom_call.1} parent=1 // pred_check_branch
      %75 = sbr.rel (0) target = $region33
    $region32: #{tpu_custom_call.1} parent=1 // pred_region
      %76 = dma.done [#allocation12], 256
    $region33: #{tpu_custom_call.1} parent=1 // pred_fallthru
      _
    %p78 = scmp.eq.s32.totalorder 0, 0
    // Predicated region
    $region34: #{tpu_custom_call.1} parent=1 // pred_check
      %p79 = pneg %p78
    $region35: #{tpu_custom_call.1} parent=1 // pred_check_branch
      %81 = sbr.rel (%p79) target = $region37
    $region36: #{tpu_custom_call.1} parent=1 // pred_region
      %vm82 = vcmask 261120
      %83 = vst.msk [vmem:[#allocation2] sm:$0xff] %vm82, 0.0
      %84 = vst.msk [vmem:[#allocation2 + $0x8] sm:$0xff] %vm82, 0.0
      %85 = vst.msk [vmem:[#allocation3] sm:$0xff] %vm82, 0.0
      %86 = vst.msk [vmem:[#allocation3 + $0x8] sm:$0xff] %vm82, 0.0
      %87 = vst.msk [vmem:[#allocation4] sm:$0xff] %vm82, 0.0
      %88 = vst.msk [vmem:[#allocation4 + $0x8] sm:$0xff] %vm82, 0.0
    $region37: #{tpu_custom_call.1} parent=1 // pred_fallthru
      _
    %v89 = vld [vmem:[#allocation5] sm:$0xff]
    %v90 = vld [vmem:[#allocation5 + $0x8] sm:$0xff]
    %v91 = vpack.c.bf16 %v90, %v89
    %v92 = vld [vmem:[#allocation2] sm:$0xff]
    %v93 = vld [vmem:[#allocation2 + $0x8] sm:$0xff]
    %v94 = vld [vmem:[#allocation8] sm:$0xf]
    %v95 = vld [vmem:[#allocation8 + $0x4] sm:$0xf]
    %v96 = vld [vmem:[#allocation8 + $0x8] sm:$0xf]
    %v97 = vld [vmem:[#allocation8 + $0xc] sm:$0xf]
    %v102 = vunpack.c.l.b16 %v94
    %v103 = vunpack.c.l.b16 %v95
    %v104 = vunpack.c.l.b16 %v96
    %v105 = vunpack.c.l.b16 %v97
    %v106 = vpack.c.b16 %v103, %v102
    %v107 = vpack.c.b16 %v105, %v104
    %vm110 = vcmask 261120
    %v112 = vsel %vm110, %v91, 0
    %114 = vmatprep.subr.bf16.mxu0 0
    %115 = vmatpush1.bf16.msra.mxu0 0
    %116 = vmatprep.subr.bf16.mxu0 0
    %117 = vmatpush1.bf16.msra.mxu0 0
    %118 = vmatprep.subr.bf16.mxu0 0
    %119 = vmatpush1.bf16.msra.mxu0 0
    %120 = vmatprep.subr.bf16.mxu0 0
    %121 = vmatpush1.bf16.msra.mxu0 0
    %122 = vmatprep.subr.bf16.mxu0 0
    %123 = vmatpush1.bf16.msra.mxu0 0
    %124 = vmatprep.subr.bf16.mxu0 0
    %125 = vmatpush1.bf16.msra.mxu0 0
    %126 = vmatprep.subr.bf16.mxu0 0
    %127 = vmatpush1.bf16.msra.mxu0 %v107
    %128 = vmatprep.subr.bf16.mxu0 0
    %129 = vmatpush1.bf16.msra.mxu0 %v106
    %130 = vmatprep.subr.bf16.mxu0 0
    %131 = vmatpush2.bf16.msra.mxu0 0
    %132 = vmatprep.subr.bf16.mxu0 0
    %133 = vmatpush2.bf16.msra.mxu0 0
    %134 = vmatprep.subr.bf16.mxu0 0
    %135 = vmatpush2.bf16.msra.mxu0 0
    %136 = vmatprep.subr.bf16.mxu0 0
    %137 = vmatpush2.bf16.msra.mxu0 0
    %138 = vmatprep.subr.bf16.mxu0 0
    %139 = vmatpush2.bf16.msra.mxu0 0
    %140 = vmatprep.subr.bf16.mxu0 0
    %141 = vmatpush2.bf16.msra.mxu0 0
    %142 = vmatprep.subr.bf16.mxu0 0
    %143 = vmatpush2.bf16.msra.mxu0 0
    %144 = vmatprep.subr.bf16.mxu0 0
    %145 = vmatpush2.bf16.msra.mxu0 0
    %146 = vmatprep.mubr.bf16.mxu0 0
    %147 = vmatmul.mubr.bf16.gmra.mxu0 %v112
    %v148 = vpop.f32.mrf.mxu0
    %v149 = vadd.f32 0.0, %v148
    %v150 = vpop.f32.mrf.mxu0
    %v151 = vpop.f32.mrf.mxu0
    %v152 = vadd.f32 0.0, %v151
    %v153 = vpop.f32.mrf.mxu0
    %154 = vdwg.mxu0
    %v155 = vadd.f32 %v92, %v149
    %v156 = vadd.f32 %v93, %v152
    %157 = vst.msk [vmem:[#allocation2] sm:$0xff] %vm110, %v155
    %158 = vst.msk [vmem:[#allocation2 + $0x8] sm:$0xff] %vm110, %v156
    %v159 = vld [vmem:[#allocation3] sm:$0xff]
    %v160 = vld [vmem:[#allocation3 + $0x8] sm:$0xff]
    %v161 = vld [vmem:[#allocation10] sm:$0xf]
    %v162 = vld [vmem:[#allocation10 + $0x4] sm:$0xf]
    %v163 = vld [vmem:[#allocation10 + $0x8] sm:$0xf]
    %v164 = vld [vmem:[#allocation10 + $0xc] sm:$0xf]
    %v169 = vunpack.c.l.b16 %v161
    %v170 = vunpack.c.l.b16 %v162
    %v171 = vunpack.c.l.b16 %v163
    %v172 = vunpack.c.l.b16 %v164
    %v173 = vpack.c.b16 %v170, %v169
    %v174 = vpack.c.b16 %v172, %v171
    %177 = vmatprep.subr.bf16.mxu0 0
    %178 = vmatpush1.bf16.msra.mxu0 0
    %179 = vmatprep.subr.bf16.mxu0 0
    %180 = vmatpush1.bf16.msra.mxu0 0
    %181 = vmatprep.subr.bf16.mxu0 0
    %182 = vmatpush1.bf16.msra.mxu0 0
    %183 = vmatprep.subr.bf16.mxu0 0
    %184 = vmatpush1.bf16.msra.mxu0 0
    %185 = vmatprep.subr.bf16.mxu0 0
    %186 = vmatpush1.bf16.msra.mxu0 0
    %187 = vmatprep.subr.bf16.mxu0 0
    %188 = vmatpush1.bf16.msra.mxu0 0
    %189 = vmatprep.subr.bf16.mxu0 0
    %190 = vmatpush1.bf16.msra.mxu0 %v174
    %191 = vmatprep.subr.bf16.mxu0 0
    %192 = vmatpush1.bf16.msra.mxu0 %v173
    %193 = vmatprep.subr.bf16.mxu0 0
    %194 = vmatpush2.bf16.msra.mxu0 0
    %195 = vmatprep.subr.bf16.mxu0 0
    %196 = vmatpush2.bf16.msra.mxu0 0
    %197 = vmatprep.subr.bf16.mxu0 0
    %198 = vmatpush2.bf16.msra.mxu0 0
    %199 = vmatprep.subr.bf16.mxu0 0
    %200 = vmatpush2.bf16.msra.mxu0 0
    %201 = vmatprep.subr.bf16.mxu0 0
    %202 = vmatpush2.bf16.msra.mxu0 0
    %203 = vmatprep.subr.bf16.mxu0 0
    %204 = vmatpush2.bf16.msra.mxu0 0
    %205 = vmatprep.subr.bf16.mxu0 0
    %206 = vmatpush2.bf16.msra.mxu0 0
    %207 = vmatprep.subr.bf16.mxu0 0
    %208 = vmatpush2.bf16.msra.mxu0 0
    %209 = vmatprep.mubr.bf16.mxu0 0
    %210 = vmatmul.mubr.bf16.gmra.mxu0 %v112
    %v211 = vpop.f32.mrf.mxu0
    %v212 = vadd.f32 0.0, %v211
    %v213 = vpop.f32.mrf.mxu0
    %v214 = vpop.f32.mrf.mxu0
    %v215 = vadd.f32 0.0, %v214
    %v216 = vpop.f32.mrf.mxu0
    %217 = vdwg.mxu0
    %v218 = vadd.f32 %v159, %v212
    %v219 = vadd.f32 %v160, %v215
    %220 = vst.msk [vmem:[#allocation3] sm:$0xff] %vm110, %v218
    %221 = vst.msk [vmem:[#allocation3 + $0x8] sm:$0xff] %vm110, %v219
    %v222 = vld [vmem:[#allocation4] sm:$0xff]
    %v223 = vld [vmem:[#allocation4 + $0x8] sm:$0xff]
    %v224 = vld [vmem:[#allocation11] sm:$0xf]
    %v225 = vld [vmem:[#allocation11 + $0x4] sm:$0xf]
    %v226 = vld [vmem:[#allocation11 + $0x8] sm:$0xf]
    %v227 = vld [vmem:[#allocation11 + $0xc] sm:$0xf]
    %v232 = vunpack.c.l.b16 %v224
    %v233 = vunpack.c.l.b16 %v225
    %v234 = vunpack.c.l.b16 %v226
    %v235 = vunpack.c.l.b16 %v227
    %v236 = vpack.c.b16 %v233, %v232
    %v237 = vpack.c.b16 %v235, %v234
    %240 = vmatprep.subr.bf16.mxu0 0
    %241 = vmatpush1.bf16.msra.mxu0 0
    %242 = vmatprep.subr.bf16.mxu0 0
    %243 = vmatpush1.bf16.msra.mxu0 0
    %244 = vmatprep.subr.bf16.mxu0 0
    %245 = vmatpush1.bf16.msra.mxu0 0
    %246 = vmatprep.subr.bf16.mxu0 0
    %247 = vmatpush1.bf16.msra.mxu0 0
    %248 = vmatprep.subr.bf16.mxu0 0
    %249 = vmatpush1.bf16.msra.mxu0 0
    %250 = vmatprep.subr.bf16.mxu0 0
    %251 = vmatpush1.bf16.msra.mxu0 0
    %252 = vmatprep.subr.bf16.mxu0 0
    %253 = vmatpush1.bf16.msra.mxu0 %v237
    %254 = vmatprep.subr.bf16.mxu0 0
    %255 = vmatpush1.bf16.msra.mxu0 %v236
    %256 = vmatprep.subr.bf16.mxu0 0
    %257 = vmatpush2.bf16.msra.mxu0 0
    %258 = vmatprep.subr.bf16.mxu0 0
    %259 = vmatpush2.bf16.msra.mxu0 0
    %260 = vmatprep.subr.bf16.mxu0 0
    %261 = vmatpush2.bf16.msra.mxu0 0
    %262 = vmatprep.subr.bf16.mxu0 0
    %263 = vmatpush2.bf16.msra.mxu0 0
    %264 = vmatprep.subr.bf16.mxu0 0
    %265 = vmatpush2.bf16.msra.mxu0 0
    %266 = vmatprep.subr.bf16.mxu0 0
    %267 = vmatpush2.bf16.msra.mxu0 0
    %268 = vmatprep.subr.bf16.mxu0 0
    %269 = vmatpush2.bf16.msra.mxu0 0
    %270 = vmatprep.subr.bf16.mxu0 0
    %271 = vmatpush2.bf16.msra.mxu0 0
    %272 = vmatprep.mubr.bf16.mxu0 0
    %273 = vmatmul.mubr.bf16.gmra.mxu0 %v112
    %v274 = vpop.f32.mrf.mxu0
    %v275 = vadd.f32 0.0, %v274
    %v276 = vpop.f32.mrf.mxu0
    %v277 = vpop.f32.mrf.mxu0
    %v278 = vadd.f32 0.0, %v277
    %v279 = vpop.f32.mrf.mxu0
    %280 = vdwg.mxu0
    %v281 = vadd.f32 %v222, %v275
    %v282 = vadd.f32 %v223, %v278
    %283 = vst.msk [vmem:[#allocation4] sm:$0xff] %vm110, %v281
    %284 = vst.msk [vmem:[#allocation4 + $0x8] sm:$0xff] %vm110, %v282
    // Predicated region
    $region38: #{tpu_custom_call.1} parent=1 // pred_check
      %p285 = pneg %p78
    $region39: #{tpu_custom_call.1} parent=1 // pred_check_branch
      %287 = sbr.rel (%p285) target = $region41
    $region40: #{tpu_custom_call.1} parent=1 // pred_region
      %v288 = vld [vmem:[#allocation2] sm:$0xff]
      %v289 = vld [vmem:[#allocation2 + $0x8] sm:$0xff]
      %v290 = vpack.c.bf16 %v289, %v288
      %v292 = vunpack.c.l.b16 %v290
      %v293 = vunpack.c.h.b16 %v290
      %v294 = vpack.c.b16 %v292, %v292
      %v295 = vpack.c.b16 %v293, %v293
      %vm298 = vcmask 257024
      %299 = vst.msk [vmem:[#allocation13] sm:$0xf] %vm298, %v294
      %300 = vst.msk [vmem:[#allocation13 + $0x4] sm:$0xf] %vm298, %v295
      %v301 = vld [vmem:[#allocation3] sm:$0xff]
      %v302 = vld [vmem:[#allocation3 + $0x8] sm:$0xff]
      %v303 = vpack.c.bf16 %v302, %v301
      %v305 = vunpack.c.l.b16 %v303
      %v306 = vunpack.c.h.b16 %v303
      %v307 = vpack.c.b16 %v305, %v305
      %v308 = vpack.c.b16 %v306, %v306
      %311 = vst.msk [vmem:[#allocation14] sm:$0xf] %vm298, %v307
      %312 = vst.msk [vmem:[#allocation14 + $0x4] sm:$0xf] %vm298, %v308
      %v313 = vld [vmem:[#allocation4] sm:$0xff]
      %v314 = vld [vmem:[#allocation4 + $0x8] sm:$0xff]
      %v315 = vpack.c.bf16 %v314, %v313
      %v317 = vunpack.c.l.b16 %v315
      %v318 = vunpack.c.h.b16 %v315
      %v319 = vpack.c.b16 %v317, %v317
      %v320 = vpack.c.b16 %v318, %v318
      %323 = vst.msk [vmem:[#allocation16] sm:$0xf] %vm298, %v319
      %324 = vst.msk [vmem:[#allocation16 + $0x4] sm:$0xf] %vm298, %v320
    $region41: #{tpu_custom_call.1} parent=1 // pred_fallthru
      _
    // Predicated region
    $region42: #{tpu_custom_call.1} parent=1 // pred_check
      _
    $region43: #{tpu_custom_call.1} parent=1 // pred_check_branch
      %326 = sbr.rel (0) target = $region45
    $region44: #{tpu_custom_call.1} parent=1 // pred_region
      %s328 = ssub.s32 128, 128
      %329 = vsyncadd [#allocation7], %s328
      %s330 = sshll.u32 [#allocation13], 4
      %s331 = int_to_ptr.vmem [resolvable:$true] %s330
      %336 = dma.vmem_to_hbm [thread:$0]  %s331, 128, %s4, [#allocation7], 64, 64, 4
    $region45: #{tpu_custom_call.1} parent=1 // pred_fallthru
      _
    // Predicated region
    $region46: #{tpu_custom_call.1} parent=1 // pred_check
      _
    $region47: #{tpu_custom_call.1} parent=1 // pred_check_branch
      %338 = sbr.rel (0) target = $region49
    $region48: #{tpu_custom_call.1} parent=1 // pred_region
      %s340 = ssub.s32 128, 128
      %341 = vsyncadd [#allocation15], %s340
      %s342 = sshll.u32 [#allocation14], 4
      %s343 = int_to_ptr.vmem [resolvable:$true] %s342
      %348 = dma.vmem_to_hbm [thread:$0]  %s343, 128, %s5, [#allocation15], 64, 64, 4
    $region49: #{tpu_custom_call.1} parent=1 // pred_fallthru
      _
    // Predicated region
    $region50: #{tpu_custom_call.1} parent=1 // pred_check
      _
    $region51: #{tpu_custom_call.1} parent=1 // pred_check_branch
      %350 = sbr.rel (0) target = $region53
    $region52: #{tpu_custom_call.1} parent=1 // pred_region
      %s352 = ssub.s32 128, 128
      %353 = vsyncadd [#allocation15], %s352
      %s354 = sshll.u32 [#allocation16], 4
      %s355 = int_to_ptr.vmem [resolvable:$true] %s354
      %360 = dma.vmem_to_hbm [thread:$0]  %s355, 128, %s6, [#allocation15], 64, 64, 4
    $region53: #{tpu_custom_call.1} parent=1 // pred_fallthru
      _
    // Predicated region
    $region54: #{tpu_custom_call.1} parent=1 // pred_check
      _
    $region55: #{tpu_custom_call.1} parent=1 // pred_check_branch
      %362 = sbr.rel (0) target = $region57
    $region56: #{tpu_custom_call.1} parent=1 // pred_region
      %363 = dma.done [#allocation7], 128
    $region57: #{tpu_custom_call.1} parent=1 // pred_fallthru
      _
    // Predicated region
    $region58: #{tpu_custom_call.1} parent=1 // pred_check
      _
    $region59: #{tpu_custom_call.1} parent=1 // pred_check_branch
      %365 = sbr.rel (0) target = $region61
    $region60: #{tpu_custom_call.1} parent=1 // pred_region
      %366 = dma.done [#allocation15], 128
    $region61: #{tpu_custom_call.1} parent=1 // pred_fallthru
      _
    // Predicated region
    $region62: #{tpu_custom_call.1} parent=1 // pred_check
      _
    $region63: #{tpu_custom_call.1} parent=1 // pred_check_branch
      %368 = sbr.rel (0) target = $region65
    $region64: #{tpu_custom_call.1} parent=1 // pred_region
      %369 = dma.done [#allocation15], 128
    $region65: #{tpu_custom_call.1} parent=1 // pred_fallthru
      _
    %370 = vsyncpa [#allocation6], 1
    %371 = vsyncpa [#allocation9], 1
    %372 = vsyncpa [#allocation12], 1
    %373 = vsyncpa [#allocation7], 1
    %374 = vsyncpa [#allocation15], 1

</llo_original>
